<compile_context>
chip_gen: v7x
topology: tpu7x:2x2x1
jax: 0.10.0
libtpu: 0.0.40
codegen_flags: <defaults>
</compile_context>

<pallas_src>
import numpy as np
import jax
import jax.numpy as jnp
from jax.experimental import pallas as pl
from jax.experimental.pallas import tpu as pltpu


_LANES = 128
_SUBLANES = 8


# ----------------------------------------------------------------------------
# Fused Pallas kernel: every prior for every stage in one launch
# ----------------------------------------------------------------------------
def _make_fused_kernel(num_stages, out_rows, r_pad, weights, row_offsets,
                       rows_per_prior):
    """Kernel over a single packed block.

    x_ref:  (num_stages + 1, r_pad, 128) f32; slab `num_stages` is the packed
            means (zeros for zero-mean priors), laid out identically to a stage.
    out_ref: (out_rows, 128) f32; row s / lane j = weight_j * sum((x - mean)^2).
    """
    num_priors = len(weights)

    def kernel(x_ref, out_ref):
        mean_blk = x_ref[num_stages]                            # (r_pad, 128)

        # Hoisted constants (one iota each; masks are compile-time shapes).
        sub = jax.lax.broadcasted_iota(jnp.int32, (r_pad, _LANES), 0)
        lane = jax.lax.broadcasted_iota(jnp.int32, (1, _LANES), 1)
        zero = jnp.float32(0.0)
        prior_masks = [
            (sub >= row_offsets[j]) & (sub < row_offsets[j] + rows_per_prior[j])
            for j in range(num_priors)
        ]

        rows = []
        for s in range(num_stages):                 # static unroll, S <= ~4
            d = x_ref[s] - mean_blk                 # zero-mean rows are zeros
            sq = d * d
            row = jnp.zeros((1, _LANES), jnp.float32)
            for j in range(num_priors):
                # weight folded as a compile-time constant; VPU+XLU reduce only
                loss = jnp.float32(weights[j]) * jnp.sum(
                    jnp.where(prior_masks[j], sq, zero))
                row = jnp.where(lane == j, loss, row)
            rows.append(row)
        if out_rows > num_stages:
            rows.append(jnp.zeros((out_rows - num_stages, _LANES), jnp.float32))

        out_ref[...] = jnp.concatenate(rows, axis=0)   # one lane-dense store

    return kernel


def fused_prior_losses(packed, weights, row_offsets, rows_per_prior):
    """Single pallas_call over the packed [S+1, R_pad, 128] buffer.

    Returns (out_rows, 128) f32 with the weighted loss of stage s / prior j at
    [s, j]; rows >= S and lanes >= P are zero.
    """
    s_plus_1, r_pad, lanes = packed.shape
    num_stages = s_plus_1 - 1
    out_rows = max(_SUBLANES, pl.cdiv(num_stages, _SUBLANES) * _SUBLANES)

    kernel = _make_fused_kernel(num_stages, out_rows, r_pad,
                                tuple(weights), tuple(row_offsets),
                                tuple(rows_per_prior))

    return pl.pallas_call(
        kernel,
        out_shape=jax.ShapeDtypeStruct((out_rows, lanes), jnp.float32),
        grid=(1,),
        in_specs=[pl.BlockSpec((s_plus_1, r_pad, lanes), lambda i: (0, 0, 0))],
        out_specs=pl.BlockSpec((out_rows, lanes), lambda i: (0, 0)),
        compiler_params=pltpu.CompilerParams(
            dimension_semantics=("arbitrary",)),
    )(packed)


# ----------------------------------------------------------------------------
# JAX port of RegularizerModule
# ----------------------------------------------------------------------------
class RegularizerModule:
    # (param_name, loss_name, weight_attr, mean_attr, is_body_level)
    _PRIOR_SPECS = (
        ('betas', 'shape_prior', 'shape_prior_weight', None, True),
        ('expression', 'expression_prior', 'expression_prior_weight',
         None, False),
        ('body_pose', 'body_pose_prior', 'body_pose_prior_weight',
         'body_pose_mean', True),
        ('left_hand_pose', 'left_hand_pose_prior',
         'left_hand_pose_prior_weight', 'left_hand_pose_mean', False),
        ('right_hand_pose', 'right_hand_pose_prior',
         'right_hand_pose_prior_weight', 'right_hand_pose_mean', False),
        ('jaw_pose', 'jaw_pose_prior', 'jaw_pose_prior_weight',
         'jaw_pose_mean', False),
    )

    def __init__(
        self,
        *,
        stages_to_penalize=(-1,),
        shape_prior_weight=1.0,
        expression_prior_weight=1.0,
        body_pose_prior_weight=1.0,
        left_hand_pose_prior_weight=0.1,
        right_hand_pose_prior_weight=0.1,
        jaw_pose_prior_weight=0.5,
        body_pose_mean=None,
        left_hand_pose_mean=None,
        right_hand_pose_mean=None,
        jaw_pose_mean=None,
    ):
        self.stages_to_regularize = list(stages_to_penalize)
        self.shape_prior_weight = float(shape_prior_weight)
        self.expression_prior_weight = float(expression_prior_weight)
        self.body_pose_prior_weight = float(body_pose_prior_weight)
        self.left_hand_pose_prior_weight = float(left_hand_pose_prior_weight)
        self.right_hand_pose_prior_weight = float(right_hand_pose_prior_weight)
        self.jaw_pose_prior_weight = float(jaw_pose_prior_weight)

        # TODO(synk): expose's body-pose prior can be a GMM (MaxMixturePrior)
        # loaded from a .pkl checkpoint; replaced here with mean-centered L2.
        self.body_pose_mean = body_pose_mean
        self.left_hand_pose_mean = left_hand_pose_mean
        self.right_hand_pose_mean = right_hand_pose_mean
        self.jaw_pose_mean = jaw_pose_mean

    # helpers -----------------------------------------------------------------
    def _prior_info(self, name):
        for n, loss_name, w_attr, m_attr, _body in self._PRIOR_SPECS:
            if n == name:
                mean = getattr(self, m_attr) if m_attr is not None else None
                return loss_name, float(getattr(self, w_attr)), mean
        raise KeyError(name)

    def _stage_active(self, parameters, penalize_only_parts=False):
        names = []
        for name, _ln, w_attr, _m_attr, body_level in self._PRIOR_SPECS:
            if float(getattr(self, w_attr)) <= 0:
                continue
            if body_level and penalize_only_parts:
                continue
            if parameters.get(name, None) is None:
                continue
            names.append(name)
        return names

    def _pack(self, stage_param_dicts, stage_active_names, union_names):
        """Build the single packed buffer [S+1, R_pad, 128] plus layout meta."""
        # Per-prior (B, D) from the first stage where that prior appears.
        dims = {}
        for name in union_names:
            for params, active in zip(stage_param_dicts, stage_active_names):
                if name in active:
                    x = jnp.asarray(params[name])
                    b = int(x.shape[0])
                    d = int(np.prod(x.shape[1:]))
                    if d > _LANES:
                        raise ValueError(
                            f'{name}: flattened dim {d} exceeds {_LANES} lanes')
                    dims[name] = (b, d)
                    break

        weights, row_offsets, rows_per = [], [], []
        mean_rows = []
        row = 0
        for name in union_names:
            _loss_name, w, mean = self._prior_info(name)
            b, d = dims[name]
            weights.append(w)
            row_offsets.append(row)
            rows_per.append(b)
            row += b
            if mean is None:
                m = jnp.zeros((1, _LANES), jnp.float32)
            else:
                m = jnp.asarray(mean, jnp.float32).reshape(1, -1)
                m = jnp.pad(m, ((0, 0), (0, _LANES - d)))
            mean_rows.append(jnp.broadcast_to(m, (b, _LANES)))
        r_total = row
        r_pad = max(_SUBLANES, ((r_total + _SUBLANES - 1) // _SUBLANES)
                    * _SUBLANES)

        mean_blk = jnp.concatenate(mean_rows, axis=0)
        mean_blk = jnp.pad(mean_blk, ((0, r_pad - r_total), (0, 0)))

        stage_blocks = []
        for params, active in zip(stage_param_dicts, stage_active_names):
            rows = []
            for name, m_rows in zip(union_names, mean_rows):
                b, d = dims[name]
                if name in active:
                    x = jnp.asarray(params[name])
                    x = x.reshape(x.shape[0], -1).astype(jnp.float32)
                    if x.shape != (b, d):
                        raise ValueError(
                            f'{name}: inconsistent shape across stages')
                    rows.append(jnp.pad(x, ((0, 0), (0, _LANES - d))))
                else:
                    # inactive this stage: fill with its mean so the kernel's
                    # (x - mean)^2 contribution is exactly zero (value unused).
                    rows.append(m_rows)
            blk = jnp.concatenate(rows, axis=0)
            stage_blocks.append(jnp.pad(blk, ((0, r_pad - r_total), (0, 0))))

        packed = jnp.stack(stage_blocks + [mean_blk], axis=0)
        return packed, tuple(weights), tuple(row_offsets), tuple(rows_per)

    # single stage --------------------------------------------------------------
    def single_regularization_step(self, parameters, penalize_only_parts=False,
                                   **kwargs):
        active = self._stage_active(parameters, penalize_only_parts)
        if not active:
            return {}
        packed, weights, row_offsets, rows_per = self._pack(
            [parameters], [active], active)
        out = fused_prior_losses(packed, weights, row_offsets, rows_per)
        vals = out[0, :len(active)]                       # one slice
        return {self._prior_info(name)[0]: vals[j]
                for j, name in enumerate(active)}

    # forward -------------------------------------------------------------------
    def __call__(self, param_list, num_stages=3, **kwargs):
        # stage selection mirrors the PyTorch forward
        stage_entries = []
        for n in range(1, num_stages + 1):
            if n not in self.stages_to_regularize:
                continue
            curr_params = param_list[n - 1]
            if curr_params is None:
                continue
            stage_entries.append((n - 1, curr_params))
        if num_stages < len(param_list) and param_list[-1] is not None:
            stage_entries.append((num_stages, param_list[-1]))

        prior_losses = {}
        if not stage_entries:
            return prior_losses

        stage_params = [p for _idx, p in stage_entries]
        stage_active = [self._stage_active(p) for p in stage_params]
        union_names = [spec[0] for spec in self._PRIOR_SPECS
                       if any(spec[0] in a for a in stage_active)]
        if not union_names:
            return prior_losses

        # ONE pallas_call for every stage and every prior.
        packed, weights, row_offsets, rows_per = self._pack(
            stage_params, stage_active, union_names)
        out = fused_prior_losses(packed, weights, row_offsets, rows_per)
        vals = out[:len(stage_entries), :len(union_names)]   # single slice

        lane_of = {name: j for j, name in enumerate(union_names)}
        for si, ((label_idx, _p), active) in enumerate(
                zip(stage_entries, stage_active)):
            for name in active:
                loss_name = self._prior_info(name)[0]
                prior_losses[f'stage_{label_idx:02d}_{loss_name}'] = \
                    vals[si, lane_of[name]]
        return prior_losses


# ----------------------------------------------------------------------------
# Demo
# ----------------------------------------------------------------------------
if __name__ == "__main__":
    key = jax.random.PRNGKey(0)
    B = 2
    NUM_BETAS = 10
    NUM_EXPR = 10
    BODY_POSE_DIM = 63        # 21 joints * 3 (axis-angle)
    HAND_PCA_DIM = 12
    JAW_DIM = 3

    # deterministic prior means
    key, k_bm, k_lm, k_rm, k_jm = jax.random.split(key, 5)
    body_pose_mean = 0.1 * jax.random.normal(k_bm, (BODY_POSE_DIM,), jnp.float32)
    left_hand_mean = 0.1 * jax.random.normal(k_lm, (HAND_PCA_DIM,), jnp.float32)
    right_hand_mean = 0.1 * jax.random.normal(k_rm, (HAND_PCA_DIM,), jnp.float32)
    jaw_mean = 0.1 * jax.random.normal(k_jm, (JAW_DIM,), jnp.float32)

    module = RegularizerModule(
        stages_to_penalize=[1, 2, 3],
        body_pose_mean=body_pose_mean,
        left_hand_pose_mean=left_hand_mean,
        right_hand_pose_mean=right_hand_mean,
        jaw_pose_mean=jaw_mean,
    )

    def make_stage_params(k):
        k1, k2, k3, k4, k5, k6 = jax.random.split(k, 6)
        return {
            'betas': jax.random.normal(k1, (B, NUM_BETAS), jnp.float32),
            'expression': jax.random.normal(k2, (B, NUM_EXPR), jnp.float32),
            'body_pose': jax.random.normal(k3, (B, BODY_POSE_DIM), jnp.float32),
            'left_hand_pose': jax.random.normal(k4, (B, HAND_PCA_DIM), jnp.float32),
            'right_hand_pose': jax.random.normal(k5, (B, HAND_PCA_DIM), jnp.float32),
            'jaw_pose': jax.random.normal(k6, (B, JAW_DIM), jnp.float32),
        }

    key, k0, k1, k2, k3 = jax.random.split(key, 5)
    # 3 intermediate stages + 1 final set of parameters
    param_list = [make_stage_params(k) for k in (k0, k1, k2, k3)]

    losses = module(param_list, num_stages=3)
    losses = jax.block_until_ready(losses)

    # sanity checks against plain-JAX references
    ref_shape = 1.0 * jnp.sum(param_list[0]['betas'] ** 2)
    assert jnp.allclose(losses['stage_00_shape_prior'], ref_shape,
                        rtol=1e-5, atol=1e-5)

    ref_expr = 1.0 * jnp.sum(param_list[1]['expression'] ** 2)
    assert jnp.allclose(losses['stage_01_expression_prior'], ref_expr,
                        rtol=1e-5, atol=1e-5)

    ref_lh = 0.1 * jnp.sum(
        (param_list[1]['left_hand_pose'] - left_hand_mean[None]) ** 2)
    assert jnp.allclose(losses['stage_01_left_hand_pose_prior'], ref_lh,
                        rtol=1e-5, atol=1e-5)

    ref_body = 1.0 * jnp.sum(
        (param_list[2]['body_pose'] - body_pose_mean[None]) ** 2)
    assert jnp.allclose(losses['stage_02_body_pose_prior'], ref_body,
                        rtol=1e-5, atol=1e-5)

    ref_jaw = 0.5 * jnp.sum(
        (param_list[3]['jaw_pose'] - jaw_mean[None]) ** 2)
    assert jnp.allclose(losses['stage_03_jaw_pose_prior'], ref_jaw,
                        rtol=1e-5, atol=1e-5)

    assert len(losses) == 4 * 6  # 4 stages x 6 priors

    # single_regularization_step path
    single = jax.block_until_ready(
        module.single_regularization_step(param_list[0]))
    assert jnp.allclose(single['shape_prior'], ref_shape, rtol=1e-5, atol=1e-5)

    print("KERNEL_OK")
</pallas_src>

<mosaic_0001>
module attributes {stable_mosaic.version = 11 : i64} {
  func.func @kernel(%arg0: i32, %arg1: memref<5x16x128xf32, #tpu.memory_space<vmem>>, %arg2: memref<8x128xf32, #tpu.memory_space<vmem>>) attributes {dimension_semantics = [#tpu.dimension_semantics<arbitrary>], iteration_bounds = array<i64: 1>, scalar_prefetch = 0 : i64, scratch_operands = 0 : i64, tpu.core_type = #tpu.core_type<tc>, window_params = [{pipeline_mode = #tpu.pipeline_mode<synchronous>, transform_indices = @transform_0, window_bounds = array<i64: 5, 16, 128>}, {pipeline_mode = #tpu.pipeline_mode<synchronous>, transform_indices = @transform_1, window_bounds = array<i64: 8, 128>}]} {
    %c4 = arith.constant 4 : index
    %c0 = arith.constant 0 : index
    %c0_0 = arith.constant 0 : index
    %0 = vector.load %arg1[%c4, %c0, %c0_0] : memref<5x16x128xf32, #tpu.memory_space<vmem>>, vector<1x16x128xf32>
    %1 = vector.shape_cast %0 : vector<1x16x128xf32> to vector<16x128xf32>
    %2 = tpu.iota {dimensions = array<i32: 0>} : vector<16x128xi32>
    %3 = tpu.iota {dimensions = array<i32: 1>} : vector<1x128xi32>
    %c0_i32 = arith.constant 0 : i32
    %4 = vector.broadcast %c0_i32 : i32 to vector<16x128xi32>
    %5 = arith.cmpi sge, %2, %4 : vector<16x128xi32>
    %c2_i32 = arith.constant 2 : i32
    %6 = vector.broadcast %c2_i32 : i32 to vector<16x128xi32>
    %7 = arith.cmpi slt, %2, %6 : vector<16x128xi32>
    %8 = arith.andi %5, %7 : vector<16x128xi1>
    %c2_i32_1 = arith.constant 2 : i32
    %9 = vector.broadcast %c2_i32_1 : i32 to vector<16x128xi32>
    %10 = arith.cmpi sge, %2, %9 : vector<16x128xi32>
    %c4_i32 = arith.constant 4 : i32
    %11 = vector.broadcast %c4_i32 : i32 to vector<16x128xi32>
    %12 = arith.cmpi slt, %2, %11 : vector<16x128xi32>
    %13 = arith.andi %10, %12 : vector<16x128xi1>
    %c4_i32_2 = arith.constant 4 : i32
    %14 = vector.broadcast %c4_i32_2 : i32 to vector<16x128xi32>
    %15 = arith.cmpi sge, %2, %14 : vector<16x128xi32>
    %c6_i32 = arith.constant 6 : i32
    %16 = vector.broadcast %c6_i32 : i32 to vector<16x128xi32>
    %17 = arith.cmpi slt, %2, %16 : vector<16x128xi32>
    %18 = arith.andi %15, %17 : vector<16x128xi1>
    %c6_i32_3 = arith.constant 6 : i32
    %19 = vector.broadcast %c6_i32_3 : i32 to vector<16x128xi32>
    %20 = arith.cmpi sge, %2, %19 : vector<16x128xi32>
    %c8_i32 = arith.constant 8 : i32
    %21 = vector.broadcast %c8_i32 : i32 to vector<16x128xi32>
    %22 = arith.cmpi slt, %2, %21 : vector<16x128xi32>
    %23 = arith.andi %20, %22 : vector<16x128xi1>
    %c8_i32_4 = arith.constant 8 : i32
    %24 = vector.broadcast %c8_i32_4 : i32 to vector<16x128xi32>
    %25 = arith.cmpi sge, %2, %24 : vector<16x128xi32>
    %c10_i32 = arith.constant 10 : i32
    %26 = vector.broadcast %c10_i32 : i32 to vector<16x128xi32>
    %27 = arith.cmpi slt, %2, %26 : vector<16x128xi32>
    %28 = arith.andi %25, %27 : vector<16x128xi1>
    %c10_i32_5 = arith.constant 10 : i32
    %29 = vector.broadcast %c10_i32_5 : i32 to vector<16x128xi32>
    %30 = arith.cmpi sge, %2, %29 : vector<16x128xi32>
    %c12_i32 = arith.constant 12 : i32
    %31 = vector.broadcast %c12_i32 : i32 to vector<16x128xi32>
    %32 = arith.cmpi slt, %2, %31 : vector<16x128xi32>
    %33 = arith.andi %30, %32 : vector<16x128xi1>
    %c0_6 = arith.constant 0 : index
    %c0_7 = arith.constant 0 : index
    %c0_8 = arith.constant 0 : index
    %34 = vector.load %arg1[%c0_6, %c0_7, %c0_8] : memref<5x16x128xf32, #tpu.memory_space<vmem>>, vector<1x16x128xf32>
    %35 = vector.shape_cast %34 : vector<1x16x128xf32> to vector<16x128xf32>
    %36 = arith.subf %35, %1 : vector<16x128xf32>
    %37 = arith.mulf %36, %36 : vector<16x128xf32>
    %cst = arith.constant 0.000000e+00 : f32
    %38 = vector.broadcast %cst : f32 to vector<1x128xf32>
    %cst_9 = arith.constant 0.000000e+00 : f32
    %39 = vector.broadcast %cst_9 : f32 to vector<16x128xf32>
    %40 = arith.select %8, %37, %39 : vector<16x128xi1>, vector<16x128xf32>
    %41 = vector.shape_cast %40 : vector<16x128xf32> to vector<1x16x128xf32>
    %cst_10 = arith.constant dense<0.000000e+00> : vector<1xf32>
    %42 = vector.multi_reduction <add>, %41, %cst_10 [1, 2] : vector<1x16x128xf32> to vector<1xf32>
    %43 = vector.shape_cast %42 : vector<1xf32> to vector<1x1x1xf32>
    %44 = vector.extract %43[0, 0, 0] : f32 from vector<1x1x1xf32>
    %cst_11 = arith.constant 1.000000e+00 : f32
    %45 = arith.mulf %cst_11, %44 : f32
    %c0_i32_12 = arith.constant 0 : i32
    %46 = vector.broadcast %c0_i32_12 : i32 to vector<1x128xi32>
    %47 = arith.cmpi eq, %3, %46 : vector<1x128xi32>
    %48 = vector.broadcast %45 : f32 to vector<1x128xf32>
    %49 = arith.select %47, %48, %38 : vector<1x128xi1>, vector<1x128xf32>
    %cst_13 = arith.constant 0.000000e+00 : f32
    %50 = vector.broadcast %cst_13 : f32 to vector<16x128xf32>
    %51 = arith.select %13, %37, %50 : vector<16x128xi1>, vector<16x128xf32>
    %52 = vector.shape_cast %51 : vector<16x128xf32> to vector<1x16x128xf32>
    %cst_14 = arith.constant dense<0.000000e+00> : vector<1xf32>
    %53 = vector.multi_reduction <add>, %52, %cst_14 [1, 2] : vector<1x16x128xf32> to vector<1xf32>
    %54 = vector.shape_cast %53 : vector<1xf32> to vector<1x1x1xf32>
    %55 = vector.extract %54[0, 0, 0] : f32 from vector<1x1x1xf32>
    %cst_15 = arith.constant 1.000000e+00 : f32
    %56 = arith.mulf %cst_15, %55 : f32
    %c1_i32 = arith.constant 1 : i32
    %57 = vector.broadcast %c1_i32 : i32 to vector<1x128xi32>
    %58 = arith.cmpi eq, %3, %57 : vector<1x128xi32>
    %59 = vector.broadcast %56 : f32 to vector<1x128xf32>
    %60 = arith.select %58, %59, %49 : vector<1x128xi1>, vector<1x128xf32>
    %cst_16 = arith.constant 0.000000e+00 : f32
    %61 = vector.broadcast %cst_16 : f32 to vector<16x128xf32>
    %62 = arith.select %18, %37, %61 : vector<16x128xi1>, vector<16x128xf32>
    %63 = vector.shape_cast %62 : vector<16x128xf32> to vector<1x16x128xf32>
    %cst_17 = arith.constant dense<0.000000e+00> : vector<1xf32>
    %64 = vector.multi_reduction <add>, %63, %cst_17 [1, 2] : vector<1x16x128xf32> to vector<1xf32>
    %65 = vector.shape_cast %64 : vector<1xf32> to vector<1x1x1xf32>
    %66 = vector.extract %65[0, 0, 0] : f32 from vector<1x1x1xf32>
    %cst_18 = arith.constant 1.000000e+00 : f32
    %67 = arith.mulf %cst_18, %66 : f32
    %c2_i32_19 = arith.constant 2 : i32
    %68 = vector.broadcast %c2_i32_19 : i32 to vector<1x128xi32>
    %69 = arith.cmpi eq, %3, %68 : vector<1x128xi32>
    %70 = vector.broadcast %67 : f32 to vector<1x128xf32>
    %71 = arith.select %69, %70, %60 : vector<1x128xi1>, vector<1x128xf32>
    %cst_20 = arith.constant 0.000000e+00 : f32
    %72 = vector.broadcast %cst_20 : f32 to vector<16x128xf32>
    %73 = arith.select %23, %37, %72 : vector<16x128xi1>, vector<16x128xf32>
    %74 = vector.shape_cast %73 : vector<16x128xf32> to vector<1x16x128xf32>
    %cst_21 = arith.constant dense<0.000000e+00> : vector<1xf32>
    %75 = vector.multi_reduction <add>, %74, %cst_21 [1, 2] : vector<1x16x128xf32> to vector<1xf32>
    %76 = vector.shape_cast %75 : vector<1xf32> to vector<1x1x1xf32>
    %77 = vector.extract %76[0, 0, 0] : f32 from vector<1x1x1xf32>
    %cst_22 = arith.constant 1.000000e-01 : f32
    %78 = arith.mulf %cst_22, %77 : f32
    %c3_i32 = arith.constant 3 : i32
    %79 = vector.broadcast %c3_i32 : i32 to vector<1x128xi32>
    %80 = arith.cmpi eq, %3, %79 : vector<1x128xi32>
    %81 = vector.broadcast %78 : f32 to vector<1x128xf32>
    %82 = arith.select %80, %81, %71 : vector<1x128xi1>, vector<1x128xf32>
    %cst_23 = arith.constant 0.000000e+00 : f32
    %83 = vector.broadcast %cst_23 : f32 to vector<16x128xf32>
    %84 = arith.select %28, %37, %83 : vector<16x128xi1>, vector<16x128xf32>
    %85 = vector.shape_cast %84 : vector<16x128xf32> to vector<1x16x128xf32>
    %cst_24 = arith.constant dense<0.000000e+00> : vector<1xf32>
    %86 = vector.multi_reduction <add>, %85, %cst_24 [1, 2] : vector<1x16x128xf32> to vector<1xf32>
    %87 = vector.shape_cast %86 : vector<1xf32> to vector<1x1x1xf32>
    %88 = vector.extract %87[0, 0, 0] : f32 from vector<1x1x1xf32>
    %cst_25 = arith.constant 1.000000e-01 : f32
    %89 = arith.mulf %cst_25, %88 : f32
    %c4_i32_26 = arith.constant 4 : i32
    %90 = vector.broadcast %c4_i32_26 : i32 to vector<1x128xi32>
    %91 = arith.cmpi eq, %3, %90 : vector<1x128xi32>
    %92 = vector.broadcast %89 : f32 to vector<1x128xf32>
    %93 = arith.select %91, %92, %82 : vector<1x128xi1>, vector<1x128xf32>
    %cst_27 = arith.constant 0.000000e+00 : f32
    %94 = vector.broadcast %cst_27 : f32 to vector<16x128xf32>
    %95 = arith.select %33, %37, %94 : vector<16x128xi1>, vector<16x128xf32>
    %96 = vector.shape_cast %95 : vector<16x128xf32> to vector<1x16x128xf32>
    %cst_28 = arith.constant dense<0.000000e+00> : vector<1xf32>
    %97 = vector.multi_reduction <add>, %96, %cst_28 [1, 2] : vector<1x16x128xf32> to vector<1xf32>
    %98 = vector.shape_cast %97 : vector<1xf32> to vector<1x1x1xf32>
    %99 = vector.extract %98[0, 0, 0] : f32 from vector<1x1x1xf32>
    %cst_29 = arith.constant 5.000000e-01 : f32
    %100 = arith.mulf %cst_29, %99 : f32
    %c5_i32 = arith.constant 5 : i32
    %101 = vector.broadcast %c5_i32 : i32 to vector<1x128xi32>
    %102 = arith.cmpi eq, %3, %101 : vector<1x128xi32>
    %103 = vector.broadcast %100 : f32 to vector<1x128xf32>
    %104 = arith.select %102, %103, %93 : vector<1x128xi1>, vector<1x128xf32>
    %c1 = arith.constant 1 : index
    %c0_30 = arith.constant 0 : index
    %c0_31 = arith.constant 0 : index
    %105 = vector.load %arg1[%c1, %c0_30, %c0_31] : memref<5x16x128xf32, #tpu.memory_space<vmem>>, vector<1x16x128xf32>
    %106 = vector.shape_cast %105 : vector<1x16x128xf32> to vector<16x128xf32>
    %107 = arith.subf %106, %1 : vector<16x128xf32>
    %108 = arith.mulf %107, %107 : vector<16x128xf32>
    %cst_32 = arith.constant 0.000000e+00 : f32
    %109 = vector.broadcast %cst_32 : f32 to vector<1x128xf32>
    %cst_33 = arith.constant 0.000000e+00 : f32
    %110 = vector.broadcast %cst_33 : f32 to vector<16x128xf32>
    %111 = arith.select %8, %108, %110 : vector<16x128xi1>, vector<16x128xf32>
    %112 = vector.shape_cast %111 : vector<16x128xf32> to vector<1x16x128xf32>
    %cst_34 = arith.constant dense<0.000000e+00> : vector<1xf32>
    %113 = vector.multi_reduction <add>, %112, %cst_34 [1, 2] : vector<1x16x128xf32> to vector<1xf32>
    %114 = vector.shape_cast %113 : vector<1xf32> to vector<1x1x1xf32>
    %115 = vector.extract %114[0, 0, 0] : f32 from vector<1x1x1xf32>
    %cst_35 = arith.constant 1.000000e+00 : f32
    %116 = arith.mulf %cst_35, %115 : f32
    %c0_i32_36 = arith.constant 0 : i32
    %117 = vector.broadcast %c0_i32_36 : i32 to vector<1x128xi32>
    %118 = arith.cmpi eq, %3, %117 : vector<1x128xi32>
    %119 = vector.broadcast %116 : f32 to vector<1x128xf32>
    %120 = arith.select %118, %119, %109 : vector<1x128xi1>, vector<1x128xf32>
    %cst_37 = arith.constant 0.000000e+00 : f32
    %121 = vector.broadcast %cst_37 : f32 to vector<16x128xf32>
    %122 = arith.select %13, %108, %121 : vector<16x128xi1>, vector<16x128xf32>
    %123 = vector.shape_cast %122 : vector<16x128xf32> to vector<1x16x128xf32>
    %cst_38 = arith.constant dense<0.000000e+00> : vector<1xf32>
    %124 = vector.multi_reduction <add>, %123, %cst_38 [1, 2] : vector<1x16x128xf32> to vector<1xf32>
    %125 = vector.shape_cast %124 : vector<1xf32> to vector<1x1x1xf32>
    %126 = vector.extract %125[0, 0, 0] : f32 from vector<1x1x1xf32>
    %cst_39 = arith.constant 1.000000e+00 : f32
    %127 = arith.mulf %cst_39, %126 : f32
    %c1_i32_40 = arith.constant 1 : i32
    %128 = vector.broadcast %c1_i32_40 : i32 to vector<1x128xi32>
    %129 = arith.cmpi eq, %3, %128 : vector<1x128xi32>
    %130 = vector.broadcast %127 : f32 to vector<1x128xf32>
    %131 = arith.select %129, %130, %120 : vector<1x128xi1>, vector<1x128xf32>
    %cst_41 = arith.constant 0.000000e+00 : f32
    %132 = vector.broadcast %cst_41 : f32 to vector<16x128xf32>
    %133 = arith.select %18, %108, %132 : vector<16x128xi1>, vector<16x128xf32>
    %134 = vector.shape_cast %133 : vector<16x128xf32> to vector<1x16x128xf32>
    %cst_42 = arith.constant dense<0.000000e+00> : vector<1xf32>
    %135 = vector.multi_reduction <add>, %134, %cst_42 [1, 2] : vector<1x16x128xf32> to vector<1xf32>
    %136 = vector.shape_cast %135 : vector<1xf32> to vector<1x1x1xf32>
    %137 = vector.extract %136[0, 0, 0] : f32 from vector<1x1x1xf32>
    %cst_43 = arith.constant 1.000000e+00 : f32
    %138 = arith.mulf %cst_43, %137 : f32
    %c2_i32_44 = arith.constant 2 : i32
    %139 = vector.broadcast %c2_i32_44 : i32 to vector<1x128xi32>
    %140 = arith.cmpi eq, %3, %139 : vector<1x128xi32>
    %141 = vector.broadcast %138 : f32 to vector<1x128xf32>
    %142 = arith.select %140, %141, %131 : vector<1x128xi1>, vector<1x128xf32>
    %cst_45 = arith.constant 0.000000e+00 : f32
    %143 = vector.broadcast %cst_45 : f32 to vector<16x128xf32>
    %144 = arith.select %23, %108, %143 : vector<16x128xi1>, vector<16x128xf32>
    %145 = vector.shape_cast %144 : vector<16x128xf32> to vector<1x16x128xf32>
    %cst_46 = arith.constant dense<0.000000e+00> : vector<1xf32>
    %146 = vector.multi_reduction <add>, %145, %cst_46 [1, 2] : vector<1x16x128xf32> to vector<1xf32>
    %147 = vector.shape_cast %146 : vector<1xf32> to vector<1x1x1xf32>
    %148 = vector.extract %147[0, 0, 0] : f32 from vector<1x1x1xf32>
    %cst_47 = arith.constant 1.000000e-01 : f32
    %149 = arith.mulf %cst_47, %148 : f32
    %c3_i32_48 = arith.constant 3 : i32
    %150 = vector.broadcast %c3_i32_48 : i32 to vector<1x128xi32>
    %151 = arith.cmpi eq, %3, %150 : vector<1x128xi32>
    %152 = vector.broadcast %149 : f32 to vector<1x128xf32>
    %153 = arith.select %151, %152, %142 : vector<1x128xi1>, vector<1x128xf32>
    %cst_49 = arith.constant 0.000000e+00 : f32
    %154 = vector.broadcast %cst_49 : f32 to vector<16x128xf32>
    %155 = arith.select %28, %108, %154 : vector<16x128xi1>, vector<16x128xf32>
    %156 = vector.shape_cast %155 : vector<16x128xf32> to vector<1x16x128xf32>
    %cst_50 = arith.constant dense<0.000000e+00> : vector<1xf32>
    %157 = vector.multi_reduction <add>, %156, %cst_50 [1, 2] : vector<1x16x128xf32> to vector<1xf32>
    %158 = vector.shape_cast %157 : vector<1xf32> to vector<1x1x1xf32>
    %159 = vector.extract %158[0, 0, 0] : f32 from vector<1x1x1xf32>
    %cst_51 = arith.constant 1.000000e-01 : f32
    %160 = arith.mulf %cst_51, %159 : f32
    %c4_i32_52 = arith.constant 4 : i32
    %161 = vector.broadcast %c4_i32_52 : i32 to vector<1x128xi32>
    %162 = arith.cmpi eq, %3, %161 : vector<1x128xi32>
    %163 = vector.broadcast %160 : f32 to vector<1x128xf32>
    %164 = arith.select %162, %163, %153 : vector<1x128xi1>, vector<1x128xf32>
    %cst_53 = arith.constant 0.000000e+00 : f32
    %165 = vector.broadcast %cst_53 : f32 to vector<16x128xf32>
    %166 = arith.select %33, %108, %165 : vector<16x128xi1>, vector<16x128xf32>
    %167 = vector.shape_cast %166 : vector<16x128xf32> to vector<1x16x128xf32>
    %cst_54 = arith.constant dense<0.000000e+00> : vector<1xf32>
    %168 = vector.multi_reduction <add>, %167, %cst_54 [1, 2] : vector<1x16x128xf32> to vector<1xf32>
    %169 = vector.shape_cast %168 : vector<1xf32> to vector<1x1x1xf32>
    %170 = vector.extract %169[0, 0, 0] : f32 from vector<1x1x1xf32>
    %cst_55 = arith.constant 5.000000e-01 : f32
    %171 = arith.mulf %cst_55, %170 : f32
    %c5_i32_56 = arith.constant 5 : i32
    %172 = vector.broadcast %c5_i32_56 : i32 to vector<1x128xi32>
    %173 = arith.cmpi eq, %3, %172 : vector<1x128xi32>
    %174 = vector.broadcast %171 : f32 to vector<1x128xf32>
    %175 = arith.select %173, %174, %164 : vector<1x128xi1>, vector<1x128xf32>
    %c2 = arith.constant 2 : index
    %c0_57 = arith.constant 0 : index
    %c0_58 = arith.constant 0 : index
    %176 = vector.load %arg1[%c2, %c0_57, %c0_58] : memref<5x16x128xf32, #tpu.memory_space<vmem>>, vector<1x16x128xf32>
    %177 = vector.shape_cast %176 : vector<1x16x128xf32> to vector<16x128xf32>
    %178 = arith.subf %177, %1 : vector<16x128xf32>
    %179 = arith.mulf %178, %178 : vector<16x128xf32>
    %cst_59 = arith.constant 0.000000e+00 : f32
    %180 = vector.broadcast %cst_59 : f32 to vector<1x128xf32>
    %cst_60 = arith.constant 0.000000e+00 : f32
    %181 = vector.broadcast %cst_60 : f32 to vector<16x128xf32>
    %182 = arith.select %8, %179, %181 : vector<16x128xi1>, vector<16x128xf32>
    %183 = vector.shape_cast %182 : vector<16x128xf32> to vector<1x16x128xf32>
    %cst_61 = arith.constant dense<0.000000e+00> : vector<1xf32>
    %184 = vector.multi_reduction <add>, %183, %cst_61 [1, 2] : vector<1x16x128xf32> to vector<1xf32>
    %185 = vector.shape_cast %184 : vector<1xf32> to vector<1x1x1xf32>
    %186 = vector.extract %185[0, 0, 0] : f32 from vector<1x1x1xf32>
    %cst_62 = arith.constant 1.000000e+00 : f32
    %187 = arith.mulf %cst_62, %186 : f32
    %c0_i32_63 = arith.constant 0 : i32
    %188 = vector.broadcast %c0_i32_63 : i32 to vector<1x128xi32>
    %189 = arith.cmpi eq, %3, %188 : vector<1x128xi32>
    %190 = vector.broadcast %187 : f32 to vector<1x128xf32>
    %191 = arith.select %189, %190, %180 : vector<1x128xi1>, vector<1x128xf32>
    %cst_64 = arith.constant 0.000000e+00 : f32
    %192 = vector.broadcast %cst_64 : f32 to vector<16x128xf32>
    %193 = arith.select %13, %179, %192 : vector<16x128xi1>, vector<16x128xf32>
    %194 = vector.shape_cast %193 : vector<16x128xf32> to vector<1x16x128xf32>
    %cst_65 = arith.constant dense<0.000000e+00> : vector<1xf32>
    %195 = vector.multi_reduction <add>, %194, %cst_65 [1, 2] : vector<1x16x128xf32> to vector<1xf32>
    %196 = vector.shape_cast %195 : vector<1xf32> to vector<1x1x1xf32>
    %197 = vector.extract %196[0, 0, 0] : f32 from vector<1x1x1xf32>
    %cst_66 = arith.constant 1.000000e+00 : f32
    %198 = arith.mulf %cst_66, %197 : f32
    %c1_i32_67 = arith.constant 1 : i32
    %199 = vector.broadcast %c1_i32_67 : i32 to vector<1x128xi32>
    %200 = arith.cmpi eq, %3, %199 : vector<1x128xi32>
    %201 = vector.broadcast %198 : f32 to vector<1x128xf32>
    %202 = arith.select %200, %201, %191 : vector<1x128xi1>, vector<1x128xf32>
    %cst_68 = arith.constant 0.000000e+00 : f32
    %203 = vector.broadcast %cst_68 : f32 to vector<16x128xf32>
    %204 = arith.select %18, %179, %203 : vector<16x128xi1>, vector<16x128xf32>
    %205 = vector.shape_cast %204 : vector<16x128xf32> to vector<1x16x128xf32>
    %cst_69 = arith.constant dense<0.000000e+00> : vector<1xf32>
    %206 = vector.multi_reduction <add>, %205, %cst_69 [1, 2] : vector<1x16x128xf32> to vector<1xf32>
    %207 = vector.shape_cast %206 : vector<1xf32> to vector<1x1x1xf32>
    %208 = vector.extract %207[0, 0, 0] : f32 from vector<1x1x1xf32>
    %cst_70 = arith.constant 1.000000e+00 : f32
    %209 = arith.mulf %cst_70, %208 : f32
    %c2_i32_71 = arith.constant 2 : i32
    %210 = vector.broadcast %c2_i32_71 : i32 to vector<1x128xi32>
    %211 = arith.cmpi eq, %3, %210 : vector<1x128xi32>
    %212 = vector.broadcast %209 : f32 to vector<1x128xf32>
    %213 = arith.select %211, %212, %202 : vector<1x128xi1>, vector<1x128xf32>
    %cst_72 = arith.constant 0.000000e+00 : f32
    %214 = vector.broadcast %cst_72 : f32 to vector<16x128xf32>
    %215 = arith.select %23, %179, %214 : vector<16x128xi1>, vector<16x128xf32>
    %216 = vector.shape_cast %215 : vector<16x128xf32> to vector<1x16x128xf32>
    %cst_73 = arith.constant dense<0.000000e+00> : vector<1xf32>
    %217 = vector.multi_reduction <add>, %216, %cst_73 [1, 2] : vector<1x16x128xf32> to vector<1xf32>
    %218 = vector.shape_cast %217 : vector<1xf32> to vector<1x1x1xf32>
    %219 = vector.extract %218[0, 0, 0] : f32 from vector<1x1x1xf32>
    %cst_74 = arith.constant 1.000000e-01 : f32
    %220 = arith.mulf %cst_74, %219 : f32
    %c3_i32_75 = arith.constant 3 : i32
    %221 = vector.broadcast %c3_i32_75 : i32 to vector<1x128xi32>
    %222 = arith.cmpi eq, %3, %221 : vector<1x128xi32>
    %223 = vector.broadcast %220 : f32 to vector<1x128xf32>
    %224 = arith.select %222, %223, %213 : vector<1x128xi1>, vector<1x128xf32>
    %cst_76 = arith.constant 0.000000e+00 : f32
    %225 = vector.broadcast %cst_76 : f32 to vector<16x128xf32>
    %226 = arith.select %28, %179, %225 : vector<16x128xi1>, vector<16x128xf32>
    %227 = vector.shape_cast %226 : vector<16x128xf32> to vector<1x16x128xf32>
    %cst_77 = arith.constant dense<0.000000e+00> : vector<1xf32>
    %228 = vector.multi_reduction <add>, %227, %cst_77 [1, 2] : vector<1x16x128xf32> to vector<1xf32>
    %229 = vector.shape_cast %228 : vector<1xf32> to vector<1x1x1xf32>
    %230 = vector.extract %229[0, 0, 0] : f32 from vector<1x1x1xf32>
    %cst_78 = arith.constant 1.000000e-01 : f32
    %231 = arith.mulf %cst_78, %230 : f32
    %c4_i32_79 = arith.constant 4 : i32
    %232 = vector.broadcast %c4_i32_79 : i32 to vector<1x128xi32>
    %233 = arith.cmpi eq, %3, %232 : vector<1x128xi32>
    %234 = vector.broadcast %231 : f32 to vector<1x128xf32>
    %235 = arith.select %233, %234, %224 : vector<1x128xi1>, vector<1x128xf32>
    %cst_80 = arith.constant 0.000000e+00 : f32
    %236 = vector.broadcast %cst_80 : f32 to vector<16x128xf32>
    %237 = arith.select %33, %179, %236 : vector<16x128xi1>, vector<16x128xf32>
    %238 = vector.shape_cast %237 : vector<16x128xf32> to vector<1x16x128xf32>
    %cst_81 = arith.constant dense<0.000000e+00> : vector<1xf32>
    %239 = vector.multi_reduction <add>, %238, %cst_81 [1, 2] : vector<1x16x128xf32> to vector<1xf32>
    %240 = vector.shape_cast %239 : vector<1xf32> to vector<1x1x1xf32>
    %241 = vector.extract %240[0, 0, 0] : f32 from vector<1x1x1xf32>
    %cst_82 = arith.constant 5.000000e-01 : f32
    %242 = arith.mulf %cst_82, %241 : f32
    %c5_i32_83 = arith.constant 5 : i32
    %243 = vector.broadcast %c5_i32_83 : i32 to vector<1x128xi32>
    %244 = arith.cmpi eq, %3, %243 : vector<1x128xi32>
    %245 = vector.broadcast %242 : f32 to vector<1x128xf32>
    %246 = arith.select %244, %245, %235 : vector<1x128xi1>, vector<1x128xf32>
    %c3 = arith.constant 3 : index
    %c0_84 = arith.constant 0 : index
    %c0_85 = arith.constant 0 : index
    %247 = vector.load %arg1[%c3, %c0_84, %c0_85] : memref<5x16x128xf32, #tpu.memory_space<vmem>>, vector<1x16x128xf32>
    %248 = vector.shape_cast %247 : vector<1x16x128xf32> to vector<16x128xf32>
    %249 = arith.subf %248, %1 : vector<16x128xf32>
    %250 = arith.mulf %249, %249 : vector<16x128xf32>
    %cst_86 = arith.constant 0.000000e+00 : f32
    %251 = vector.broadcast %cst_86 : f32 to vector<1x128xf32>
    %cst_87 = arith.constant 0.000000e+00 : f32
    %252 = vector.broadcast %cst_87 : f32 to vector<16x128xf32>
    %253 = arith.select %8, %250, %252 : vector<16x128xi1>, vector<16x128xf32>
    %254 = vector.shape_cast %253 : vector<16x128xf32> to vector<1x16x128xf32>
    %cst_88 = arith.constant dense<0.000000e+00> : vector<1xf32>
    %255 = vector.multi_reduction <add>, %254, %cst_88 [1, 2] : vector<1x16x128xf32> to vector<1xf32>
    %256 = vector.shape_cast %255 : vector<1xf32> to vector<1x1x1xf32>
    %257 = vector.extract %256[0, 0, 0] : f32 from vector<1x1x1xf32>
    %cst_89 = arith.constant 1.000000e+00 : f32
    %258 = arith.mulf %cst_89, %257 : f32
    %c0_i32_90 = arith.constant 0 : i32
    %259 = vector.broadcast %c0_i32_90 : i32 to vector<1x128xi32>
    %260 = arith.cmpi eq, %3, %259 : vector<1x128xi32>
    %261 = vector.broadcast %258 : f32 to vector<1x128xf32>
    %262 = arith.select %260, %261, %251 : vector<1x128xi1>, vector<1x128xf32>
    %cst_91 = arith.constant 0.000000e+00 : f32
    %263 = vector.broadcast %cst_91 : f32 to vector<16x128xf32>
    %264 = arith.select %13, %250, %263 : vector<16x128xi1>, vector<16x128xf32>
    %265 = vector.shape_cast %264 : vector<16x128xf32> to vector<1x16x128xf32>
    %cst_92 = arith.constant dense<0.000000e+00> : vector<1xf32>
    %266 = vector.multi_reduction <add>, %265, %cst_92 [1, 2] : vector<1x16x128xf32> to vector<1xf32>
    %267 = vector.shape_cast %266 : vector<1xf32> to vector<1x1x1xf32>
    %268 = vector.extract %267[0, 0, 0] : f32 from vector<1x1x1xf32>
    %cst_93 = arith.constant 1.000000e+00 : f32
    %269 = arith.mulf %cst_93, %268 : f32
    %c1_i32_94 = arith.constant 1 : i32
    %270 = vector.broadcast %c1_i32_94 : i32 to vector<1x128xi32>
    %271 = arith.cmpi eq, %3, %270 : vector<1x128xi32>
    %272 = vector.broadcast %269 : f32 to vector<1x128xf32>
    %273 = arith.select %271, %272, %262 : vector<1x128xi1>, vector<1x128xf32>
    %cst_95 = arith.constant 0.000000e+00 : f32
    %274 = vector.broadcast %cst_95 : f32 to vector<16x128xf32>
    %275 = arith.select %18, %250, %274 : vector<16x128xi1>, vector<16x128xf32>
    %276 = vector.shape_cast %275 : vector<16x128xf32> to vector<1x16x128xf32>
    %cst_96 = arith.constant dense<0.000000e+00> : vector<1xf32>
    %277 = vector.multi_reduction <add>, %276, %cst_96 [1, 2] : vector<1x16x128xf32> to vector<1xf32>
    %278 = vector.shape_cast %277 : vector<1xf32> to vector<1x1x1xf32>
    %279 = vector.extract %278[0, 0, 0] : f32 from vector<1x1x1xf32>
    %cst_97 = arith.constant 1.000000e+00 : f32
    %280 = arith.mulf %cst_97, %279 : f32
    %c2_i32_98 = arith.constant 2 : i32
    %281 = vector.broadcast %c2_i32_98 : i32 to vector<1x128xi32>
    %282 = arith.cmpi eq, %3, %281 : vector<1x128xi32>
    %283 = vector.broadcast %280 : f32 to vector<1x128xf32>
    %284 = arith.select %282, %283, %273 : vector<1x128xi1>, vector<1x128xf32>
    %cst_99 = arith.constant 0.000000e+00 : f32
    %285 = vector.broadcast %cst_99 : f32 to vector<16x128xf32>
    %286 = arith.select %23, %250, %285 : vector<16x128xi1>, vector<16x128xf32>
    %287 = vector.shape_cast %286 : vector<16x128xf32> to vector<1x16x128xf32>
    %cst_100 = arith.constant dense<0.000000e+00> : vector<1xf32>
    %288 = vector.multi_reduction <add>, %287, %cst_100 [1, 2] : vector<1x16x128xf32> to vector<1xf32>
    %289 = vector.shape_cast %288 : vector<1xf32> to vector<1x1x1xf32>
    %290 = vector.extract %289[0, 0, 0] : f32 from vector<1x1x1xf32>
    %cst_101 = arith.constant 1.000000e-01 : f32
    %291 = arith.mulf %cst_101, %290 : f32
    %c3_i32_102 = arith.constant 3 : i32
    %292 = vector.broadcast %c3_i32_102 : i32 to vector<1x128xi32>
    %293 = arith.cmpi eq, %3, %292 : vector<1x128xi32>
    %294 = vector.broadcast %291 : f32 to vector<1x128xf32>
    %295 = arith.select %293, %294, %284 : vector<1x128xi1>, vector<1x128xf32>
    %cst_103 = arith.constant 0.000000e+00 : f32
    %296 = vector.broadcast %cst_103 : f32 to vector<16x128xf32>
    %297 = arith.select %28, %250, %296 : vector<16x128xi1>, vector<16x128xf32>
    %298 = vector.shape_cast %297 : vector<16x128xf32> to vector<1x16x128xf32>
    %cst_104 = arith.constant dense<0.000000e+00> : vector<1xf32>
    %299 = vector.multi_reduction <add>, %298, %cst_104 [1, 2] : vector<1x16x128xf32> to vector<1xf32>
    %300 = vector.shape_cast %299 : vector<1xf32> to vector<1x1x1xf32>
    %301 = vector.extract %300[0, 0, 0] : f32 from vector<1x1x1xf32>
    %cst_105 = arith.constant 1.000000e-01 : f32
    %302 = arith.mulf %cst_105, %301 : f32
    %c4_i32_106 = arith.constant 4 : i32
    %303 = vector.broadcast %c4_i32_106 : i32 to vector<1x128xi32>
    %304 = arith.cmpi eq, %3, %303 : vector<1x128xi32>
    %305 = vector.broadcast %302 : f32 to vector<1x128xf32>
    %306 = arith.select %304, %305, %295 : vector<1x128xi1>, vector<1x128xf32>
    %cst_107 = arith.constant 0.000000e+00 : f32
    %307 = vector.broadcast %cst_107 : f32 to vector<16x128xf32>
    %308 = arith.select %33, %250, %307 : vector<16x128xi1>, vector<16x128xf32>
    %309 = vector.shape_cast %308 : vector<16x128xf32> to vector<1x16x128xf32>
    %cst_108 = arith.constant dense<0.000000e+00> : vector<1xf32>
    %310 = vector.multi_reduction <add>, %309, %cst_108 [1, 2] : vector<1x16x128xf32> to vector<1xf32>
    %311 = vector.shape_cast %310 : vector<1xf32> to vector<1x1x1xf32>
    %312 = vector.extract %311[0, 0, 0] : f32 from vector<1x1x1xf32>
    %cst_109 = arith.constant 5.000000e-01 : f32
    %313 = arith.mulf %cst_109, %312 : f32
    %c5_i32_110 = arith.constant 5 : i32
    %314 = vector.broadcast %c5_i32_110 : i32 to vector<1x128xi32>
    %315 = arith.cmpi eq, %3, %314 : vector<1x128xi32>
    %316 = vector.broadcast %313 : f32 to vector<1x128xf32>
    %317 = arith.select %315, %316, %306 : vector<1x128xi1>, vector<1x128xf32>
    %cst_111 = arith.constant 0.000000e+00 : f32
    %318 = vector.broadcast %cst_111 : f32 to vector<4x128xf32>
    %319 = tpu.concatenate %104, %175, %246, %317, %318 in 0 : vector<1x128xf32>, vector<1x128xf32>, vector<1x128xf32>, vector<1x128xf32>, vector<4x128xf32> -> vector<8x128xf32>
    %c0_112 = arith.constant 0 : index
    %c0_113 = arith.constant 0 : index
    %320 = vector.load %arg2[%c0_112, %c0_113] : memref<8x128xf32, #tpu.memory_space<vmem>>, vector<8x128xf32>
    tpu.vector_store %arg2[%c0_112, %c0_113], %319 {strides = array<i32>} : memref<8x128xf32, #tpu.memory_space<vmem>>, vector<8x128xf32>,
    return
  }
  func.func @transform_0(%arg0: i32) -> (i32, i32, i32) {
    %c0_i32 = arith.constant 0 : i32
    %c0_i32_0 = arith.constant 0 : i32
    %c0_i32_1 = arith.constant 0 : i32
    %c0_i32_2 = arith.constant 0 : i32
    return %c0_i32, %c0_i32_0, %c0_i32_1 : i32, i32, i32
  }
  func.func @transform_1(%arg0: i32) -> (i32, i32) {
    %c0_i32 = arith.constant 0 : i32
    %c0_i32_0 = arith.constant 0 : i32
    %c0_i32_1 = arith.constant 0 : i32
    return %c0_i32, %c0_i32_0 : i32, i32
  }
}

</mosaic_0001>

<llo_original>
// kernel: tpu_custom_call.1
$region0: #{tpu_custom_call.1}
  #allocation0 [shape = 'u32[]', space=smem, size = 0x4, offset = 0x4, fixed_abs, tag = 'smem constant byte address 0x4 - core index']
  #allocation1 [shape = 'u32[144,128]{1,0:T(1,128)}', space=vmem, size = 0x12000, scoped, tag = 'internal scratch']
  %s0 = inlined_call_operand.hbm [shape: f32[5,16,128], index: 0, kind: input, shape index: {}]
  %s1 = inlined_call_operand.hbm [shape: f32[8,128], index: 1, kind: output, shape index: {}]
  %s2 = sld [smem:[#allocation0]]
  $region18: #{tpu_custom_call.1} parent=0
    _
  %s4 = ssub.s32 1, %s2
  %s5 = scalar_select 0, %s4, %s2
  $region1: #{tpu_custom_call.1} parent=0
    #allocation2 [shape = 'u8[40960]{0}', space=vmem, size = 0xa000, scoped, tag = 'input window, operand 0, single buffered']
    #allocation3 [shape = 's32[1]{0}', space=sflag, size = 0x4, scoped, tag = 'scoped memory for tpu_custom_call.1']
    #allocation4 [shape = 's32[1]{0}', space=sflag, size = 0x4, scoped, tag = 'scoped memory for tpu_custom_call.1']
    #allocation5 [shape = 'u8[4096]{0}', space=vmem, size = 0x1000, scoped, tag = 'output window, operand 0, single buffered']
    %6 = vsyncpa [#allocation3], 0
    %7 = vsyncpa [#allocation4], 0
    // Predicated region
    $region2: #{tpu_custom_call.1} parent=1 // pred_check
      _
    $region3: #{tpu_custom_call.1} parent=1 // pred_check_branch
      %9 = sbr.rel (0) target = $region5
    $region4: #{tpu_custom_call.1} parent=1 // pred_region
      %s11 = ssub.s32 1280, 1280
      %12 = vsyncadd [#allocation3], %s11
      %s13 = sshll.u32 [#allocation2], 4
      %s14 = int_to_ptr.vmem [resolvable:$true] %s13
      %19 = dma.hbm_to_vmem [thread:$0]  %s0, 1280, %s14, [#allocation3], 128, 128, 8
    $region5: #{tpu_custom_call.1} parent=1 // pred_fallthru
      _
    // Predicated region
    $region6: #{tpu_custom_call.1} parent=1 // pred_check
      _
    $region7: #{tpu_custom_call.1} parent=1 // pred_check_branch
      %21 = sbr.rel (0) target = $region9
    $region8: #{tpu_custom_call.1} parent=1 // pred_region
      %22 = dma.done [#allocation3], 1280
    $region9: #{tpu_custom_call.1} parent=1 // pred_fallthru
      _
    %s23 = scalar_lea.vmem [#allocation2], 64
    %v24 = vld [vmem:[%s23] sm:$0xff]
    %v25 = vld [vmem:[%s23 + $0x8] sm:$0xff]
    %v26 = vlaneseq
    %v27 = vshrl.u32 %v26, 7
    %v28 = vadd.s32 %v27, 8
    %v29 = vlaneseq
    %v30 = vand.u32 %v29, 127
    %vm31 = vcmp.ge.s32.totalorder %v27, 0
    %vm32 = vcmp.ge.s32.totalorder %v28, 0
    %vm33 = vcmp.lt.s32.totalorder %v27, 2
    %vm34 = vcmp.lt.s32.totalorder %v28, 2
    %vm35 = vmand %vm31, %vm33
    %vm36 = vmand %vm32, %vm34
    %vm37 = vcmp.ge.s32.totalorder %v27, 2
    %vm38 = vcmp.ge.s32.totalorder %v28, 2
    %vm39 = vcmp.lt.s32.totalorder %v27, 4
    %vm40 = vcmp.lt.s32.totalorder %v28, 4
    %vm41 = vmand %vm37, %vm39
    %vm42 = vmand %vm38, %vm40
    %vm43 = vcmp.ge.s32.totalorder %v27, 4
    %vm44 = vcmp.ge.s32.totalorder %v28, 4
    %vm45 = vcmp.lt.s32.totalorder %v27, 6
    %vm46 = vcmp.lt.s32.totalorder %v28, 6
    %vm47 = vmand %vm43, %vm45
    %vm48 = vmand %vm44, %vm46
    %vm49 = vcmp.ge.s32.totalorder %v27, 6
    %vm50 = vcmp.ge.s32.totalorder %v28, 6
    %vm51 = vcmp.lt.s32.totalorder %v27, 8
    %vm52 = vcmp.lt.s32.totalorder %v28, 8
    %vm53 = vmand %vm49, %vm51
    %vm54 = vmand %vm50, %vm52
    %vm55 = vcmp.ge.s32.totalorder %v27, 8
    %vm56 = vcmp.ge.s32.totalorder %v28, 8
    %vm57 = vcmp.lt.s32.totalorder %v27, 10
    %vm58 = vcmp.lt.s32.totalorder %v28, 10
    %vm59 = vmand %vm55, %vm57
    %vm60 = vmand %vm56, %vm58
    %vm61 = vcmp.ge.s32.totalorder %v27, 10
    %vm62 = vcmp.ge.s32.totalorder %v28, 10
    %vm63 = vcmp.lt.s32.totalorder %v27, 12
    %vm64 = vcmp.lt.s32.totalorder %v28, 12
    %vm65 = vmand %vm61, %vm63
    %vm66 = vmand %vm62, %vm64
    %v67 = vld [vmem:[#allocation2] sm:$0xff]
    %v68 = vld [vmem:[#allocation2 + $0x8] sm:$0xff]
    %v69 = vsub.f32 %v67, %v24
    %v70 = vsub.f32 %v68, %v25
    %v71 = vmul.f32 %v69, %v69
    %v72 = vmul.f32 %v70, %v70
    %v73 = vsel %vm35, %v71, 0.0
    %v74 = vsel %vm36, %v72, 0.0
    %v75 = vadd.f32 %v73, %v74
    %76 = vadd.xlane.f32.xlu0 %v75
    %v77 = vpop.xlane.xlu0 %76
    %v78 = vrot.slane %v77, 4
    %v79 = vadd.f32 %v77, %v78
    %v80 = vrot.slane %v79, 2
    %v81 = vadd.f32 %v79, %v80
    %v82 = vrot.slane %v81, 1
    %v83 = vadd.f32 %v81, %v82
    %s84 = vtos %v83
    %vm85 = vcmp.eq.s32.totalorder %v30, 0
    %v86 = vstv %s84
    %v87 = vsel %vm85, %v86, 0.0
    %v88 = vsel %vm41, %v71, 0.0
    %v89 = vsel %vm42, %v72, 0.0
    %v90 = vadd.f32 %v88, %v89
    %91 = vadd.xlane.f32.xlu0 %v90
    %v92 = vpop.xlane.xlu0 %91
    %v93 = vrot.slane %v92, 4
    %v94 = vadd.f32 %v92, %v93
    %v95 = vrot.slane %v94, 2
    %v96 = vadd.f32 %v94, %v95
    %v97 = vrot.slane %v96, 1
    %v98 = vadd.f32 %v96, %v97
    %s99 = vtos %v98
    %vm100 = vcmp.eq.s32.totalorder %v30, 1
    %v101 = vstv %s99
    %v102 = vsel %vm100, %v101, %v87
    %v103 = vsel %vm47, %v71, 0.0
    %v104 = vsel %vm48, %v72, 0.0
    %v105 = vadd.f32 %v103, %v104
    %106 = vadd.xlane.f32.xlu0 %v105
    %v107 = vpop.xlane.xlu0 %106
    %v108 = vrot.slane %v107, 4
    %v109 = vadd.f32 %v107, %v108
    %v110 = vrot.slane %v109, 2
    %v111 = vadd.f32 %v109, %v110
    %v112 = vrot.slane %v111, 1
    %v113 = vadd.f32 %v111, %v112
    %s114 = vtos %v113
    %vm115 = vcmp.eq.s32.totalorder %v30, 2
    %v116 = vstv %s114
    %v117 = vsel %vm115, %v116, %v102
    %v118 = vsel %vm53, %v71, 0.0
    %v119 = vsel %vm54, %v72, 0.0
    %v120 = vadd.f32 %v118, %v119
    %121 = vadd.xlane.f32.xlu0 %v120
    %v122 = vpop.xlane.xlu0 %121
    %v123 = vrot.slane %v122, 4
    %v124 = vadd.f32 %v122, %v123
    %v125 = vrot.slane %v124, 2
    %v126 = vadd.f32 %v124, %v125
    %v127 = vrot.slane %v126, 1
    %v128 = vadd.f32 %v126, %v127
    %s129 = vtos %v128
    %s130 = smul.f32 %s129, 0.1
    %vm131 = vcmp.eq.s32.totalorder %v30, 3
    %v132 = vstv %s130
    %v133 = vsel %vm131, %v132, %v117
    %v134 = vsel %vm59, %v71, 0.0
    %v135 = vsel %vm60, %v72, 0.0
    %v136 = vadd.f32 %v134, %v135
    %137 = vadd.xlane.f32.xlu0 %v136
    %v138 = vpop.xlane.xlu0 %137
    %v139 = vrot.slane %v138, 4
    %v140 = vadd.f32 %v138, %v139
    %v141 = vrot.slane %v140, 2
    %v142 = vadd.f32 %v140, %v141
    %v143 = vrot.slane %v142, 1
    %v144 = vadd.f32 %v142, %v143
    %s145 = vtos %v144
    %s146 = smul.f32 %s145, 0.1
    %vm147 = vcmp.eq.s32.totalorder %v30, 4
    %v148 = vstv %s146
    %v149 = vsel %vm147, %v148, %v133
    %v150 = vsel %vm65, %v71, 0.0
    %v151 = vsel %vm66, %v72, 0.0
    %v152 = vadd.f32 %v150, %v151
    %153 = vadd.xlane.f32.xlu0 %v152
    %v154 = vpop.xlane.xlu0 %153
    %v155 = vrot.slane %v154, 4
    %v156 = vadd.f32 %v154, %v155
    %v157 = vrot.slane %v156, 2
    %v158 = vadd.f32 %v156, %v157
    %v159 = vrot.slane %v158, 1
    %v160 = vadd.f32 %v158, %v159
    %s161 = vtos %v160
    %s162 = smul.f32 %s161, 0.5
    %vm163 = vcmp.eq.s32.totalorder %v30, 5
    %v164 = vstv %s162
    %v165 = vsel %vm163, %v164, %v149
    %s166 = scalar_lea.vmem [#allocation2], 16
    %v167 = vld [vmem:[%s166] sm:$0xff]
    %v168 = vld [vmem:[%s166 + $0x8] sm:$0xff]
    %v169 = vsub.f32 %v167, %v24
    %v170 = vsub.f32 %v168, %v25
    %v171 = vmul.f32 %v169, %v169
    %v172 = vmul.f32 %v170, %v170
    %v173 = vsel %vm35, %v171, 0.0
    %v174 = vsel %vm36, %v172, 0.0
    %v175 = vadd.f32 %v173, %v174
    %176 = vadd.xlane.f32.xlu0 %v175
    %v177 = vpop.xlane.xlu0 %176
    %v178 = vrot.slane %v177, 4
    %v179 = vadd.f32 %v177, %v178
    %v180 = vrot.slane %v179, 2
    %v181 = vadd.f32 %v179, %v180
    %v182 = vrot.slane %v181, 1
    %v183 = vadd.f32 %v181, %v182
    %s184 = vtos %v183
    %v185 = vstv %s184
    %v186 = vsel %vm85, %v185, 0.0
    %v187 = vsel %vm41, %v171, 0.0
    %v188 = vsel %vm42, %v172, 0.0
    %v189 = vadd.f32 %v187, %v188
    %190 = vadd.xlane.f32.xlu0 %v189
    %v191 = vpop.xlane.xlu0 %190
    %v192 = vrot.slane %v191, 4
    %v193 = vadd.f32 %v191, %v192
    %v194 = vrot.slane %v193, 2
    %v195 = vadd.f32 %v193, %v194
    %v196 = vrot.slane %v195, 1
    %v197 = vadd.f32 %v195, %v196
    %s198 = vtos %v197
    %v199 = vstv %s198
    %v200 = vsel %vm100, %v199, %v186
    %v201 = vsel %vm47, %v171, 0.0
    %v202 = vsel %vm48, %v172, 0.0
    %v203 = vadd.f32 %v201, %v202
    %204 = vadd.xlane.f32.xlu0 %v203
    %v205 = vpop.xlane.xlu0 %204
    %v206 = vrot.slane %v205, 4
    %v207 = vadd.f32 %v205, %v206
    %v208 = vrot.slane %v207, 2
    %v209 = vadd.f32 %v207, %v208
    %v210 = vrot.slane %v209, 1
    %v211 = vadd.f32 %v209, %v210
    %s212 = vtos %v211
    %v213 = vstv %s212
    %v214 = vsel %vm115, %v213, %v200
    %v215 = vsel %vm53, %v171, 0.0
    %v216 = vsel %vm54, %v172, 0.0
    %v217 = vadd.f32 %v215, %v216
    %218 = vadd.xlane.f32.xlu0 %v217
    %v219 = vpop.xlane.xlu0 %218
    %v220 = vrot.slane %v219, 4
    %v221 = vadd.f32 %v219, %v220
    %v222 = vrot.slane %v221, 2
    %v223 = vadd.f32 %v221, %v222
    %v224 = vrot.slane %v223, 1
    %v225 = vadd.f32 %v223, %v224
    %s226 = vtos %v225
    %s227 = smul.f32 %s226, 0.1
    %v228 = vstv %s227
    %v229 = vsel %vm131, %v228, %v214
    %v230 = vsel %vm59, %v171, 0.0
    %v231 = vsel %vm60, %v172, 0.0
    %v232 = vadd.f32 %v230, %v231
    %233 = vadd.xlane.f32.xlu0 %v232
    %v234 = vpop.xlane.xlu0 %233
    %v235 = vrot.slane %v234, 4
    %v236 = vadd.f32 %v234, %v235
    %v237 = vrot.slane %v236, 2
    %v238 = vadd.f32 %v236, %v237
    %v239 = vrot.slane %v238, 1
    %v240 = vadd.f32 %v238, %v239
    %s241 = vtos %v240
    %s242 = smul.f32 %s241, 0.1
    %v243 = vstv %s242
    %v244 = vsel %vm147, %v243, %v229
    %v245 = vsel %vm65, %v171, 0.0
    %v246 = vsel %vm66, %v172, 0.0
    %v247 = vadd.f32 %v245, %v246
    %248 = vadd.xlane.f32.xlu0 %v247
    %v249 = vpop.xlane.xlu0 %248
    %v250 = vrot.slane %v249, 4
    %v251 = vadd.f32 %v249, %v250
    %v252 = vrot.slane %v251, 2
    %v253 = vadd.f32 %v251, %v252
    %v254 = vrot.slane %v253, 1
    %v255 = vadd.f32 %v253, %v254
    %s256 = vtos %v255
    %s257 = smul.f32 %s256, 0.5
    %v258 = vstv %s257
    %v259 = vsel %vm163, %v258, %v244
    %s260 = scalar_lea.vmem [#allocation2], 32
    %v261 = vld [vmem:[%s260] sm:$0xff]
    %v262 = vld [vmem:[%s260 + $0x8] sm:$0xff]
    %v263 = vsub.f32 %v261, %v24
    %v264 = vsub.f32 %v262, %v25
    %v265 = vmul.f32 %v263, %v263
    %v266 = vmul.f32 %v264, %v264
    %v267 = vsel %vm35, %v265, 0.0
    %v268 = vsel %vm36, %v266, 0.0
    %v269 = vadd.f32 %v267, %v268
    %270 = vadd.xlane.f32.xlu0 %v269
    %v271 = vpop.xlane.xlu0 %270
    %v272 = vrot.slane %v271, 4
    %v273 = vadd.f32 %v271, %v272
    %v274 = vrot.slane %v273, 2
    %v275 = vadd.f32 %v273, %v274
    %v276 = vrot.slane %v275, 1
    %v277 = vadd.f32 %v275, %v276
    %s278 = vtos %v277
    %v279 = vstv %s278
    %v280 = vsel %vm85, %v279, 0.0
    %v281 = vsel %vm41, %v265, 0.0
    %v282 = vsel %vm42, %v266, 0.0
    %v283 = vadd.f32 %v281, %v282
    %284 = vadd.xlane.f32.xlu0 %v283
    %v285 = vpop.xlane.xlu0 %284
    %v286 = vrot.slane %v285, 4
    %v287 = vadd.f32 %v285, %v286
    %v288 = vrot.slane %v287, 2
    %v289 = vadd.f32 %v287, %v288
    %v290 = vrot.slane %v289, 1
    %v291 = vadd.f32 %v289, %v290
    %s292 = vtos %v291
    %v293 = vstv %s292
    %v294 = vsel %vm100, %v293, %v280
    %v295 = vsel %vm47, %v265, 0.0
    %v296 = vsel %vm48, %v266, 0.0
    %v297 = vadd.f32 %v295, %v296
    %298 = vadd.xlane.f32.xlu0 %v297
    %v299 = vpop.xlane.xlu0 %298
    %v300 = vrot.slane %v299, 4
    %v301 = vadd.f32 %v299, %v300
    %v302 = vrot.slane %v301, 2
    %v303 = vadd.f32 %v301, %v302
    %v304 = vrot.slane %v303, 1
    %v305 = vadd.f32 %v303, %v304
    %s306 = vtos %v305
    %v307 = vstv %s306
    %v308 = vsel %vm115, %v307, %v294
    %v309 = vsel %vm53, %v265, 0.0
    %v310 = vsel %vm54, %v266, 0.0
    %v311 = vadd.f32 %v309, %v310
    %312 = vadd.xlane.f32.xlu0 %v311
    %v313 = vpop.xlane.xlu0 %312
    %v314 = vrot.slane %v313, 4
    %v315 = vadd.f32 %v313, %v314
    %v316 = vrot.slane %v315, 2
    %v317 = vadd.f32 %v315, %v316
    %v318 = vrot.slane %v317, 1
    %v319 = vadd.f32 %v317, %v318
    %s320 = vtos %v319
    %s321 = smul.f32 %s320, 0.1
    %v322 = vstv %s321
    %v323 = vsel %vm131, %v322, %v308
    %v324 = vsel %vm59, %v265, 0.0
    %v325 = vsel %vm60, %v266, 0.0
    %v326 = vadd.f32 %v324, %v325
    %327 = vadd.xlane.f32.xlu0 %v326
    %v328 = vpop.xlane.xlu0 %327
    %v329 = vrot.slane %v328, 4
    %v330 = vadd.f32 %v328, %v329
    %v331 = vrot.slane %v330, 2
    %v332 = vadd.f32 %v330, %v331
    %v333 = vrot.slane %v332, 1
    %v334 = vadd.f32 %v332, %v333
    %s335 = vtos %v334
    %s336 = smul.f32 %s335, 0.1
    %v337 = vstv %s336
    %v338 = vsel %vm147, %v337, %v323
    %v339 = vsel %vm65, %v265, 0.0
    %v340 = vsel %vm66, %v266, 0.0
    %v341 = vadd.f32 %v339, %v340
    %342 = vadd.xlane.f32.xlu0 %v341
    %v343 = vpop.xlane.xlu0 %342
    %v344 = vrot.slane %v343, 4
    %v345 = vadd.f32 %v343, %v344
    %v346 = vrot.slane %v345, 2
    %v347 = vadd.f32 %v345, %v346
    %v348 = vrot.slane %v347, 1
    %v349 = vadd.f32 %v347, %v348
    %s350 = vtos %v349
    %s351 = smul.f32 %s350, 0.5
    %v352 = vstv %s351
    %v353 = vsel %vm163, %v352, %v338
    %s354 = scalar_lea.vmem [#allocation2], 48
    %v355 = vld [vmem:[%s354] sm:$0xff]
    %v356 = vld [vmem:[%s354 + $0x8] sm:$0xff]
    %v357 = vsub.f32 %v355, %v24
    %v358 = vsub.f32 %v356, %v25
    %v359 = vmul.f32 %v357, %v357
    %v360 = vmul.f32 %v358, %v358
    %v361 = vsel %vm35, %v359, 0.0
    %v362 = vsel %vm36, %v360, 0.0
    %v363 = vadd.f32 %v361, %v362
    %364 = vadd.xlane.f32.xlu0 %v363
    %v365 = vpop.xlane.xlu0 %364
    %v366 = vrot.slane %v365, 4
    %v367 = vadd.f32 %v365, %v366
    %v368 = vrot.slane %v367, 2
    %v369 = vadd.f32 %v367, %v368
    %v370 = vrot.slane %v369, 1
    %v371 = vadd.f32 %v369, %v370
    %s372 = vtos %v371
    %v373 = vstv %s372
    %v374 = vsel %vm85, %v373, 0.0
    %v375 = vsel %vm41, %v359, 0.0
    %v376 = vsel %vm42, %v360, 0.0
    %v377 = vadd.f32 %v375, %v376
    %378 = vadd.xlane.f32.xlu0 %v377
    %v379 = vpop.xlane.xlu0 %378
    %v380 = vrot.slane %v379, 4
    %v381 = vadd.f32 %v379, %v380
    %v382 = vrot.slane %v381, 2
    %v383 = vadd.f32 %v381, %v382
    %v384 = vrot.slane %v383, 1
    %v385 = vadd.f32 %v383, %v384
    %s386 = vtos %v385
    %v387 = vstv %s386
    %v388 = vsel %vm100, %v387, %v374
    %v389 = vsel %vm47, %v359, 0.0
    %v390 = vsel %vm48, %v360, 0.0
    %v391 = vadd.f32 %v389, %v390
    %392 = vadd.xlane.f32.xlu0 %v391
    %v393 = vpop.xlane.xlu0 %392
    %v394 = vrot.slane %v393, 4
    %v395 = vadd.f32 %v393, %v394
    %v396 = vrot.slane %v395, 2
    %v397 = vadd.f32 %v395, %v396
    %v398 = vrot.slane %v397, 1
    %v399 = vadd.f32 %v397, %v398
    %s400 = vtos %v399
    %v401 = vstv %s400
    %v402 = vsel %vm115, %v401, %v388
    %v403 = vsel %vm53, %v359, 0.0
    %v404 = vsel %vm54, %v360, 0.0
    %v405 = vadd.f32 %v403, %v404
    %406 = vadd.xlane.f32.xlu0 %v405
    %v407 = vpop.xlane.xlu0 %406
    %v408 = vrot.slane %v407, 4
    %v409 = vadd.f32 %v407, %v408
    %v410 = vrot.slane %v409, 2
    %v411 = vadd.f32 %v409, %v410
    %v412 = vrot.slane %v411, 1
    %v413 = vadd.f32 %v411, %v412
    %s414 = vtos %v413
    %s415 = smul.f32 %s414, 0.1
    %v416 = vstv %s415
    %v417 = vsel %vm131, %v416, %v402
    %v418 = vsel %vm59, %v359, 0.0
    %v419 = vsel %vm60, %v360, 0.0
    %v420 = vadd.f32 %v418, %v419
    %421 = vadd.xlane.f32.xlu0 %v420
    %v422 = vpop.xlane.xlu0 %421
    %v423 = vrot.slane %v422, 4
    %v424 = vadd.f32 %v422, %v423
    %v425 = vrot.slane %v424, 2
    %v426 = vadd.f32 %v424, %v425
    %v427 = vrot.slane %v426, 1
    %v428 = vadd.f32 %v426, %v427
    %s429 = vtos %v428
    %s430 = smul.f32 %s429, 0.1
    %v431 = vstv %s430
    %v432 = vsel %vm147, %v431, %v417
    %v433 = vsel %vm65, %v359, 0.0
    %v434 = vsel %vm66, %v360, 0.0
    %v435 = vadd.f32 %v433, %v434
    %436 = vadd.xlane.f32.xlu0 %v435
    %v437 = vpop.xlane.xlu0 %436
    %v438 = vrot.slane %v437, 4
    %v439 = vadd.f32 %v437, %v438
    %v440 = vrot.slane %v439, 2
    %v441 = vadd.f32 %v439, %v440
    %v442 = vrot.slane %v441, 1
    %v443 = vadd.f32 %v441, %v442
    %s444 = vtos %v443
    %s445 = smul.f32 %s444, 0.5
    %v446 = vstv %s445
    %v447 = vsel %vm163, %v446, %v432
    %vm448 = vcmask 1040384
    %v449 = vsel %vm448, %v165, %v259
    %vm450 = vcmask 1041408
    %v451 = vsel %vm450, %v449, %v353
    %vm452 = vcmask 1042432
    %v453 = vsel %vm452, %v451, %v447
    %vm454 = vcmask 1043456
    %v455 = vsel %vm454, %v453, 0.0
    %456 = vst [vmem:[#allocation5] sm:$0xff] %v455
    // Predicated region
    $region10: #{tpu_custom_call.1} parent=1 // pred_check
      _
    $region11: #{tpu_custom_call.1} parent=1 // pred_check_branch
      %458 = sbr.rel (0) target = $region13
    $region12: #{tpu_custom_call.1} parent=1 // pred_region
      %s460 = ssub.s32 128, 128
      %461 = vsyncadd [#allocation4], %s460
      %s463 = sshll.u32 [#allocation5], 4
      %s464 = int_to_ptr.vmem [resolvable:$true] %s463
      %466 = dma.vmem_to_hbm [thread:$0]  %s464, 128, %s1, [#allocation4]
    $region13: #{tpu_custom_call.1} parent=1 // pred_fallthru
      _
    // Predicated region
    $region14: #{tpu_custom_call.1} parent=1 // pred_check
      _
    $region15: #{tpu_custom_call.1} parent=1 // pred_check_branch
      %468 = sbr.rel (0) target = $region17
    $region16: #{tpu_custom_call.1} parent=1 // pred_region
      %469 = dma.done [#allocation4], 128
    $region17: #{tpu_custom_call.1} parent=1 // pred_fallthru
      _
    %470 = vsyncpa [#allocation3], 1
    %471 = vsyncpa [#allocation4], 1

</llo_original>
